<compile_context>
chip_gen: v7x
topology: tpu7x:2x2x1
jax: 0.10.0
libtpu: 0.0.40
codegen_flags: <defaults>
</compile_context>

<pallas_src>
import functools

import jax
import jax.numpy as jnp
from jax.experimental import pallas as pl
from jax.experimental.pallas import tpu as pltpu


def invnet_kernel(z0_ref, z1_ref, w1a_ref, w1b_ref, b1_ref, w2_ref, b2_ref, out_ref):
    # hidden = tanh(z0 @ W1a + z1 @ W1b + b1)   (split matmul replaces lane concat)
    h = jnp.tanh(
        jnp.dot(z0_ref[...], w1a_ref[...], preferred_element_type=jnp.float32)
        + jnp.dot(z1_ref[...], w1b_ref[...], preferred_element_type=jnp.float32)
        + b1_ref[...]
    )
    # logits = hidden @ W2 + b2   (narrow [TB, A] store; masked vst is cheap,
    # the DMA bytes are what matter)
    out = jnp.dot(h, w2_ref[...], preferred_element_type=jnp.float32) + b2_ref[...]
    out_ref[...] = out.astype(out_ref.dtype)


@functools.partial(jax.jit, static_argnames=("max_batch_tile",))
def invnet_forward(z0, z1, params, *, max_batch_tile: int = 8192):
    w1, b1, w2, b2 = params
    B, D = z0.shape
    H = w1.shape[1]
    A = w2.shape[1]

    # Batch tiling: full-extent block for small B (block dim == array dim is always
    # legal), otherwise tiles of max_batch_tile rows (multiple of 8) with a ragged
    # last block handled by Pallas.
    assert max_batch_tile % 8 == 0
    if B <= max_batch_tile:
        TB = B
    else:
        TB = max_batch_tile
    grid = (pl.cdiv(B, TB),)

    # Split W1 so the kernel never concatenates along lanes.
    w1a = w1[:D, :]
    w1b = w1[D:, :]
    b1_r = b1.reshape(1, H)
    b2_r = b2.reshape(1, A)

    cost = pl.CostEstimate(
        flops=2 * B * (2 * D * H + H * A),
        transcendentals=B * H,
        bytes_accessed=(B * (2 * D + A) + 2 * D * H + H + H * A + A) * 4,
    )

    # VMEM footprint: z0/z1/out blocks are lane-padded to 128 in VMEM regardless of
    # their logical last dim, so each costs TB*512 B per buffer, double-buffered.
    vmem_needed = 3 * 2 * TB * 128 * 4 + (2 * D * H + H + H * 128 + 128) * 4
    vmem_limit = max(32 << 20, int(vmem_needed * 3 // 2))
    vmem_limit = min(vmem_limit, 60 << 20)  # stay under v7x's 64 MiB physical VMEM

    grid_spec = pltpu.PrefetchScalarGridSpec(
        num_scalar_prefetch=0,
        grid=grid,
        in_specs=[
            pl.BlockSpec((TB, D), lambda i: (i, 0)),   # z0 tile
            pl.BlockSpec((TB, D), lambda i: (i, 0)),   # z1 tile
            pl.BlockSpec((D, H), lambda i: (0, 0)),    # W1[:D]  (resident)
            pl.BlockSpec((D, H), lambda i: (0, 0)),    # W1[D:]  (resident)
            pl.BlockSpec((1, H), lambda i: (0, 0)),    # b1      (resident)
            pl.BlockSpec((H, A), lambda i: (0, 0)),    # W2      (resident)
            pl.BlockSpec((1, A), lambda i: (0, 0)),    # b2      (resident)
        ],
        out_specs=pl.BlockSpec((TB, A), lambda i: (i, 0)),
    )

    out = pl.pallas_call(
        invnet_kernel,
        out_shape=jax.ShapeDtypeStruct((B, A), z0.dtype),
        grid_spec=grid_spec,
        compiler_params=pltpu.CompilerParams(
            dimension_semantics=("parallel",),
            vmem_limit_bytes=vmem_limit,
        ),
        cost_estimate=cost,
    )(z0, z1, w1a, w1b, b1_r, w2, b2_r)

    return out


def init_invnet_params(key, n_actions, n_latent_dims=4, n_units_per_layer=32):
    """Deterministic init mimicking torch.nn.Linear default (uniform +-1/sqrt(fan_in))."""
    k1, k2, k3, k4 = jax.random.split(key, 4)
    fan1 = 2 * n_latent_dims
    bound1 = 1.0 / jnp.sqrt(fan1)
    w1 = jax.random.uniform(k1, (fan1, n_units_per_layer), jnp.float32, -bound1, bound1)
    b1 = jax.random.uniform(k2, (n_units_per_layer,), jnp.float32, -bound1, bound1)
    fan2 = n_units_per_layer
    bound2 = 1.0 / jnp.sqrt(fan2)
    w2 = jax.random.uniform(k3, (fan2, n_actions), jnp.float32, -bound2, bound2)
    b2 = jax.random.uniform(k4, (n_actions,), jnp.float32, -bound2, bound2)
    return w1, b1, w2, b2


def invnet_reference(z0, z1, params):
    w1, b1, w2, b2 = params
    x = jnp.concatenate([z0, z1], axis=-1)
    h = jnp.tanh(x @ w1 + b1)
    return h @ w2 + b2


if __name__ == "__main__":
    key = jax.random.PRNGKey(0)
    B, n_latent_dims, n_actions = 2, 4, 6
    kp, kz0, kz1 = jax.random.split(key, 3)

    params = init_invnet_params(kp, n_actions, n_latent_dims=n_latent_dims)
    z0 = jax.random.normal(kz0, (B, n_latent_dims), jnp.float32)
    z1 = jax.random.normal(kz1, (B, n_latent_dims), jnp.float32)

    out = invnet_forward(z0, z1, params)
    out = jax.block_until_ready(out)

    ref = invnet_reference(z0, z1, params)
    assert out.shape == (B, n_actions)
    assert jnp.allclose(out, ref, atol=1e-5, rtol=1e-5)

    # Sanity-check a batch that is not a multiple of 8 (single ragged block).
    B2 = 3001
    kz0b, kz1b = jax.random.split(jax.random.PRNGKey(1), 2)
    z0b = jax.random.normal(kz0b, (B2, n_latent_dims), jnp.float32)
    z1b = jax.random.normal(kz1b, (B2, n_latent_dims), jnp.float32)
    out_b = jax.block_until_ready(invnet_forward(z0b, z1b, params))
    ref_b = invnet_reference(z0b, z1b, params)
    assert out_b.shape == (B2, n_actions)
    assert jnp.allclose(out_b, ref_b, atol=1e-5, rtol=1e-5)

    # Sanity-check a batch that spans multiple grid tiles with a ragged tail.
    B3 = 20000
    kz0c, kz1c = jax.random.split(jax.random.PRNGKey(2), 2)
    z0c = jax.random.normal(kz0c, (B3, n_latent_dims), jnp.float32)
    z1c = jax.random.normal(kz1c, (B3, n_latent_dims), jnp.float32)
    out_c = jax.block_until_ready(invnet_forward(z0c, z1c, params))
    ref_c = invnet_reference(z0c, z1c, params)
    assert out_c.shape == (B3, n_actions)
    assert jnp.allclose(out_c, ref_c, atol=1e-5, rtol=1e-5)

    print("KERNEL_OK")
</pallas_src>

<mosaic_0001>
module attributes {stable_mosaic.version = 11 : i64} {
  func.func @invnet_kernel(%arg0: i32, %arg1: memref<2x4xf32, #tpu.memory_space<vmem>>, %arg2: memref<2x4xf32, #tpu.memory_space<vmem>>, %arg3: memref<4x32xf32, #tpu.memory_space<vmem>>, %arg4: memref<4x32xf32, #tpu.memory_space<vmem>>, %arg5: memref<1x32xf32, #tpu.memory_space<vmem>>, %arg6: memref<32x6xf32, #tpu.memory_space<vmem>>, %arg7: memref<1x6xf32, #tpu.memory_space<vmem>>, %arg8: memref<2x6xf32, #tpu.memory_space<vmem>>) attributes {dimension_semantics = [#tpu.dimension_semantics<parallel>], iteration_bounds = array<i64: 1>, scalar_prefetch = 0 : i64, scratch_operands = 0 : i64, tpu.core_type = #tpu.core_type<tc>, window_params = [{transform_indices = @transform_0, window_bounds = array<i64: 2, 4>}, {transform_indices = @transform_1, window_bounds = array<i64: 2, 4>}, {pipeline_mode = #tpu.pipeline_mode<synchronous>, transform_indices = @transform_2, window_bounds = array<i64: 4, 32>}, {pipeline_mode = #tpu.pipeline_mode<synchronous>, transform_indices = @transform_3, window_bounds = array<i64: 4, 32>}, {pipeline_mode = #tpu.pipeline_mode<synchronous>, transform_indices = @transform_4, window_bounds = array<i64: 1, 32>}, {pipeline_mode = #tpu.pipeline_mode<synchronous>, transform_indices = @transform_5, window_bounds = array<i64: 32, 6>}, {pipeline_mode = #tpu.pipeline_mode<synchronous>, transform_indices = @transform_6, window_bounds = array<i64: 1, 6>}, {transform_indices = @transform_7, window_bounds = array<i64: 2, 6>}]} {
    %c0 = arith.constant 0 : index
    %c0_0 = arith.constant 0 : index
    %0 = vector.load %arg1[%c0, %c0_0] : memref<2x4xf32, #tpu.memory_space<vmem>>, vector<2x4xf32>
    %c0_1 = arith.constant 0 : index
    %c0_2 = arith.constant 0 : index
    %1 = vector.load %arg3[%c0_1, %c0_2] : memref<4x32xf32, #tpu.memory_space<vmem>>, vector<4x32xf32>
    %cst = arith.constant dense<0.000000e+00> : vector<2x32xf32>
    %2 = tpu.matmul %0, %1, %cst {dimension_numbers = #tpu.dot_dimension_numbers<[1], [0], [0], [1], [0, 0, 1, 1], [], []>} : vector<2x4xf32>, vector<4x32xf32>, vector<2x32xf32> -> vector<2x32xf32>
    %c0_3 = arith.constant 0 : index
    %c0_4 = arith.constant 0 : index
    %3 = vector.load %arg2[%c0_3, %c0_4] : memref<2x4xf32, #tpu.memory_space<vmem>>, vector<2x4xf32>
    %c0_5 = arith.constant 0 : index
    %c0_6 = arith.constant 0 : index
    %4 = vector.load %arg4[%c0_5, %c0_6] : memref<4x32xf32, #tpu.memory_space<vmem>>, vector<4x32xf32>
    %cst_7 = arith.constant dense<0.000000e+00> : vector<2x32xf32>
    %5 = tpu.matmul %3, %4, %cst_7 {dimension_numbers = #tpu.dot_dimension_numbers<[1], [0], [0], [1], [0, 0, 1, 1], [], []>} : vector<2x4xf32>, vector<4x32xf32>, vector<2x32xf32> -> vector<2x32xf32>
    %6 = arith.addf %2, %5 : vector<2x32xf32>
    %c0_8 = arith.constant 0 : index
    %c0_9 = arith.constant 0 : index
    %7 = vector.load %arg5[%c0_8, %c0_9] : memref<1x32xf32, #tpu.memory_space<vmem>>, vector<1x32xf32>
    %8 = vector.broadcast %7 : vector<1x32xf32> to vector<2x32xf32>
    %9 = arith.addf %6, %8 : vector<2x32xf32>
    %10 = math.tanh %9 : vector<2x32xf32>
    %c0_10 = arith.constant 0 : index
    %c0_11 = arith.constant 0 : index
    %11 = vector.load %arg6[%c0_10, %c0_11] : memref<32x6xf32, #tpu.memory_space<vmem>>, vector<32x6xf32>
    %cst_12 = arith.constant dense<0.000000e+00> : vector<2x6xf32>
    %12 = tpu.matmul %10, %11, %cst_12 {dimension_numbers = #tpu.dot_dimension_numbers<[1], [0], [0], [1], [0, 0, 1, 1], [], []>} : vector<2x32xf32>, vector<32x6xf32>, vector<2x6xf32> -> vector<2x6xf32>
    %c0_13 = arith.constant 0 : index
    %c0_14 = arith.constant 0 : index
    %13 = vector.load %arg7[%c0_13, %c0_14] : memref<1x6xf32, #tpu.memory_space<vmem>>, vector<1x6xf32>
    %14 = vector.broadcast %13 : vector<1x6xf32> to vector<2x6xf32>
    %15 = arith.addf %12, %14 : vector<2x6xf32>
    %c0_15 = arith.constant 0 : index
    %c0_16 = arith.constant 0 : index
    %16 = vector.load %arg8[%c0_15, %c0_16] : memref<2x6xf32, #tpu.memory_space<vmem>>, vector<2x6xf32>
    tpu.vector_store %arg8[%c0_15, %c0_16], %15 {strides = array<i32>} : memref<2x6xf32, #tpu.memory_space<vmem>>, vector<2x6xf32>,
    return
  }
  func.func @transform_0(%arg0: i32) -> (i32, i32) {
    %c0_i32 = arith.constant 0 : i32
    %c0_i32_0 = arith.constant 0 : i32
    return %arg0, %c0_i32 : i32, i32
  }
  func.func @transform_1(%arg0: i32) -> (i32, i32) {
    %c0_i32 = arith.constant 0 : i32
    %c0_i32_0 = arith.constant 0 : i32
    return %arg0, %c0_i32 : i32, i32
  }
  func.func @transform_2(%arg0: i32) -> (i32, i32) {
    %c0_i32 = arith.constant 0 : i32
    %c0_i32_0 = arith.constant 0 : i32
    %c0_i32_1 = arith.constant 0 : i32
    return %c0_i32, %c0_i32_0 : i32, i32
  }
  func.func @transform_3(%arg0: i32) -> (i32, i32) {
    %c0_i32 = arith.constant 0 : i32
    %c0_i32_0 = arith.constant 0 : i32
    %c0_i32_1 = arith.constant 0 : i32
    return %c0_i32, %c0_i32_0 : i32, i32
  }
  func.func @transform_4(%arg0: i32) -> (i32, i32) {
    %c0_i32 = arith.constant 0 : i32
    %c0_i32_0 = arith.constant 0 : i32
    %c0_i32_1 = arith.constant 0 : i32
    return %c0_i32, %c0_i32_0 : i32, i32
  }
  func.func @transform_5(%arg0: i32) -> (i32, i32) {
    %c0_i32 = arith.constant 0 : i32
    %c0_i32_0 = arith.constant 0 : i32
    %c0_i32_1 = arith.constant 0 : i32
    return %c0_i32, %c0_i32_0 : i32, i32
  }
  func.func @transform_6(%arg0: i32) -> (i32, i32) {
    %c0_i32 = arith.constant 0 : i32
    %c0_i32_0 = arith.constant 0 : i32
    %c0_i32_1 = arith.constant 0 : i32
    return %c0_i32, %c0_i32_0 : i32, i32
  }
  func.func @transform_7(%arg0: i32) -> (i32, i32) {
    %c0_i32 = arith.constant 0 : i32
    %c0_i32_0 = arith.constant 0 : i32
    return %arg0, %c0_i32 : i32, i32
  }
}

</mosaic_0001>

<llo_original>
// kernel: invnet_forward.1
$region0: #{invnet_forward.1}
  #allocation0 [shape = 'u32[]', space=smem, size = 0x4, offset = 0x4, fixed_abs, tag = 'smem constant byte address 0x4 - core index']
  #allocation1 [shape = 'u32[144,128]{1,0:T(1,128)}', space=vmem, size = 0x12000, scoped, tag = 'internal scratch']
  %s0 = inlined_call_operand.vmem [shape: f32[2,4], index: 0, kind: input, shape index: {}]
  %s1 = inlined_call_operand.vmem [shape: f32[2,4], index: 1, kind: input, shape index: {}]
  %s2 = inlined_call_operand.vmem [shape: f32[4,32], index: 2, kind: input, shape index: {}]
  %s3 = inlined_call_operand.vmem [shape: f32[4,32], index: 3, kind: input, shape index: {}]
  %s4 = inlined_call_operand.vmem [shape: f32[1,32], index: 4, kind: input, shape index: {}]
  %s5 = inlined_call_operand.vmem [shape: f32[32,6], index: 5, kind: input, shape index: {}]
  %s6 = inlined_call_operand.vmem [shape: f32[1,6], index: 6, kind: input, shape index: {}]
  %s7 = inlined_call_operand.hbm [shape: f32[2,6], index: 7, kind: output, shape index: {}]
  %s8 = sld [smem:[#allocation0]]
  $region38: #{invnet_forward.1} parent=0
    _
  %s10 = ssub.s32 1, %s8
  %s11 = scalar_select 0, %s10, %s8
  $region1: #{invnet_forward.1} parent=0
    #allocation2 [shape = 'u8[1024]{0}', space=vmem, size = 0x400, scoped, tag = 'output window, operand 0, single buffered']
    #allocation3 [shape = 's32[1]{0}', space=sflag, size = 0x4, scoped, tag = 'scoped memory for invnet_forward.1']
    %12 = vsyncpa [#allocation3], 0
    // Predicated region
    $region2: #{invnet_forward.1} parent=1 // pred_check
      _
    $region3: #{invnet_forward.1} parent=1 // pred_check_branch
      %14 = sbr.rel (0) target = $region5
    $region4: #{invnet_forward.1} parent=1 // pred_region
      _
    $region5: #{invnet_forward.1} parent=1 // pred_fallthru
      _
    // Predicated region
    $region6: #{invnet_forward.1} parent=1 // pred_check
      _
    $region7: #{invnet_forward.1} parent=1 // pred_check_branch
      %16 = sbr.rel (0) target = $region9
    $region8: #{invnet_forward.1} parent=1 // pred_region
      _
    $region9: #{invnet_forward.1} parent=1 // pred_fallthru
      _
    // Predicated region
    $region10: #{invnet_forward.1} parent=1 // pred_check
      _
    $region11: #{invnet_forward.1} parent=1 // pred_check_branch
      %18 = sbr.rel (0) target = $region13
    $region12: #{invnet_forward.1} parent=1 // pred_region
      _
    $region13: #{invnet_forward.1} parent=1 // pred_fallthru
      _
    // Predicated region
    $region14: #{invnet_forward.1} parent=1 // pred_check
      _
    $region15: #{invnet_forward.1} parent=1 // pred_check_branch
      %20 = sbr.rel (0) target = $region17
    $region16: #{invnet_forward.1} parent=1 // pred_region
      _
    $region17: #{invnet_forward.1} parent=1 // pred_fallthru
      _
    // Predicated region
    $region18: #{invnet_forward.1} parent=1 // pred_check
      _
    $region19: #{invnet_forward.1} parent=1 // pred_check_branch
      %22 = sbr.rel (0) target = $region21
    $region20: #{invnet_forward.1} parent=1 // pred_region
      _
    $region21: #{invnet_forward.1} parent=1 // pred_fallthru
      _
    // Predicated region
    $region22: #{invnet_forward.1} parent=1 // pred_check
      _
    $region23: #{invnet_forward.1} parent=1 // pred_check_branch
      %24 = sbr.rel (0) target = $region25
    $region24: #{invnet_forward.1} parent=1 // pred_region
      _
    $region25: #{invnet_forward.1} parent=1 // pred_fallthru
      _
    // Predicated region
    $region26: #{invnet_forward.1} parent=1 // pred_check
      _
    $region27: #{invnet_forward.1} parent=1 // pred_check_branch
      %26 = sbr.rel (0) target = $region29
    $region28: #{invnet_forward.1} parent=1 // pred_region
      _
    $region29: #{invnet_forward.1} parent=1 // pred_fallthru
      _
    %v27 = vld [vmem:[%s0] sm:$0x3]
    %v28 = vld [vmem:[%s2] sm:$0xf]
    %v29 = vld [vmem:[%s1] sm:$0x3]
    %v30 = vld [vmem:[%s3] sm:$0xf]
    %vm31 = vcmask 31744
    %v33 = vsel %vm31, %v29, 0
    %vm35 = vcmask 1043456
    %v37 = vsel %vm35, %v30, 0
    %39 = vmatprep.subr.mxu0 0.0
    %40 = vmatpush1.msra.mxu0 %v37
    %41 = vmatprep.subr.mxu0 0.0
    %42 = vmatpush1.msra.mxu0 0.0
    %43 = vmatprep.subr.mxu0 0.0
    %44 = vmatpush1.msra.mxu0 0.0
    %45 = vmatprep.subr.mxu0 0.0
    %46 = vmatpush1.msra.mxu0 0.0
    %47 = vmatprep.subr.mxu0 0.0
    %48 = vmatpush1.msra.mxu0 0.0
    %49 = vmatprep.subr.mxu0 0.0
    %50 = vmatpush1.msra.mxu0 0.0
    %51 = vmatprep.subr.mxu0 0.0
    %52 = vmatpush1.msra.mxu0 0.0
    %53 = vmatprep.subr.mxu0 0.0
    %54 = vmatpush1.msra.mxu0 0.0
    %55 = vmatprep.subr.mxu0 0.0
    %56 = vmatpush1.msra.mxu0 0.0
    %57 = vmatprep.subr.mxu0 0.0
    %58 = vmatpush1.msra.mxu0 0.0
    %59 = vmatprep.subr.mxu0 0.0
    %60 = vmatpush1.msra.mxu0 0.0
    %61 = vmatprep.subr.mxu0 0.0
    %62 = vmatpush1.msra.mxu0 0.0
    %63 = vmatprep.subr.mxu0 0.0
    %64 = vmatpush1.msra.mxu0 0.0
    %65 = vmatprep.subr.mxu0 0.0
    %66 = vmatpush1.msra.mxu0 0.0
    %67 = vmatprep.subr.mxu0 0.0
    %68 = vmatpush1.msra.mxu0 0.0
    %69 = vmatprep.subr.mxu0 0.0
    %70 = vmatpush1.msra.mxu0 0.0
    %71 = vmatprep.subr.mxu0 0.0
    %72 = vmatpush1.msra.mxu0 0.0
    %73 = vmatprep.subr.mxu0 0.0
    %74 = vmatpush1.msra.mxu0 0.0
    %75 = vmatprep.subr.mxu0 0.0
    %76 = vmatpush1.msra.mxu0 0.0
    %77 = vmatprep.subr.mxu0 0.0
    %78 = vmatpush1.msra.mxu0 0.0
    %79 = vmatprep.subr.mxu0 0.0
    %80 = vmatpush1.msra.mxu0 0.0
    %81 = vmatprep.subr.mxu0 0.0
    %82 = vmatpush1.msra.mxu0 0.0
    %83 = vmatprep.subr.mxu0 0.0
    %84 = vmatpush1.msra.mxu0 0.0
    %85 = vmatprep.subr.mxu0 0.0
    %86 = vmatpush1.msra.mxu0 0.0
    %87 = vmatprep.subr.mxu0 0.0
    %88 = vmatpush1.msra.mxu0 0.0
    %89 = vmatprep.subr.mxu0 0.0
    %90 = vmatpush1.msra.mxu0 0.0
    %91 = vmatprep.subr.mxu0 0.0
    %92 = vmatpush1.msra.mxu0 0.0
    %93 = vmatprep.subr.mxu0 0.0
    %94 = vmatpush1.msra.mxu0 0.0
    %95 = vmatprep.subr.mxu0 0.0
    %96 = vmatpush1.msra.mxu0 0.0
    %97 = vmatprep.subr.mxu0 0.0
    %98 = vmatpush1.msra.mxu0 0.0
    %99 = vmatprep.subr.mxu0 0.0
    %100 = vmatpush1.msra.mxu0 0.0
    %101 = vmatprep.subr.mxu0 0.0
    %102 = vmatpush1.msra.mxu0 0.0
    %103 = vmatprep.mubr.f32.mxu0 0.0
    %104 = vmatmul.mubr.f32.gmra.mrb[0].mxu0 %v33
    %v105 = vpop.f32.mrb[0].mxu0
    %v106 = vadd.f32 0.0, %v105
    %v107 = vpop.f32.mrb[0].mxu0
    %108 = vdwg.mxu0
    %v110 = vsel %vm31, %v27, 0
    %v113 = vsel %vm35, %v28, 0
    %115 = vmatprep.subr.mxu0 0.0
    %116 = vmatpush1.msra.mxu0 %v113
    %117 = vmatprep.subr.mxu0 0.0
    %118 = vmatpush1.msra.mxu0 0.0
    %119 = vmatprep.subr.mxu0 0.0
    %120 = vmatpush1.msra.mxu0 0.0
    %121 = vmatprep.subr.mxu0 0.0
    %122 = vmatpush1.msra.mxu0 0.0
    %123 = vmatprep.subr.mxu0 0.0
    %124 = vmatpush1.msra.mxu0 0.0
    %125 = vmatprep.subr.mxu0 0.0
    %126 = vmatpush1.msra.mxu0 0.0
    %127 = vmatprep.subr.mxu0 0.0
    %128 = vmatpush1.msra.mxu0 0.0
    %129 = vmatprep.subr.mxu0 0.0
    %130 = vmatpush1.msra.mxu0 0.0
    %131 = vmatprep.subr.mxu0 0.0
    %132 = vmatpush1.msra.mxu0 0.0
    %133 = vmatprep.subr.mxu0 0.0
    %134 = vmatpush1.msra.mxu0 0.0
    %135 = vmatprep.subr.mxu0 0.0
    %136 = vmatpush1.msra.mxu0 0.0
    %137 = vmatprep.subr.mxu0 0.0
    %138 = vmatpush1.msra.mxu0 0.0
    %139 = vmatprep.subr.mxu0 0.0
    %140 = vmatpush1.msra.mxu0 0.0
    %141 = vmatprep.subr.mxu0 0.0
    %142 = vmatpush1.msra.mxu0 0.0
    %143 = vmatprep.subr.mxu0 0.0
    %144 = vmatpush1.msra.mxu0 0.0
    %145 = vmatprep.subr.mxu0 0.0
    %146 = vmatpush1.msra.mxu0 0.0
    %147 = vmatprep.subr.mxu0 0.0
    %148 = vmatpush1.msra.mxu0 0.0
    %149 = vmatprep.subr.mxu0 0.0
    %150 = vmatpush1.msra.mxu0 0.0
    %151 = vmatprep.subr.mxu0 0.0
    %152 = vmatpush1.msra.mxu0 0.0
    %153 = vmatprep.subr.mxu0 0.0
    %154 = vmatpush1.msra.mxu0 0.0
    %155 = vmatprep.subr.mxu0 0.0
    %156 = vmatpush1.msra.mxu0 0.0
    %157 = vmatprep.subr.mxu0 0.0
    %158 = vmatpush1.msra.mxu0 0.0
    %159 = vmatprep.subr.mxu0 0.0
    %160 = vmatpush1.msra.mxu0 0.0
    %161 = vmatprep.subr.mxu0 0.0
    %162 = vmatpush1.msra.mxu0 0.0
    %163 = vmatprep.subr.mxu0 0.0
    %164 = vmatpush1.msra.mxu0 0.0
    %165 = vmatprep.subr.mxu0 0.0
    %166 = vmatpush1.msra.mxu0 0.0
    %167 = vmatprep.subr.mxu0 0.0
    %168 = vmatpush1.msra.mxu0 0.0
    %169 = vmatprep.subr.mxu0 0.0
    %170 = vmatpush1.msra.mxu0 0.0
    %171 = vmatprep.subr.mxu0 0.0
    %172 = vmatpush1.msra.mxu0 0.0
    %173 = vmatprep.subr.mxu0 0.0
    %174 = vmatpush1.msra.mxu0 0.0
    %175 = vmatprep.subr.mxu0 0.0
    %176 = vmatpush1.msra.mxu0 0.0
    %177 = vmatprep.subr.mxu0 0.0
    %178 = vmatpush1.msra.mxu0 0.0
    %179 = vmatprep.mubr.f32.mxu0 0.0
    %180 = vmatmul.mubr.f32.gmra.mrb[0].mxu0 %v110
    %v181 = vpop.f32.mrb[0].mxu0
    %v182 = vadd.f32 %v106, %v181
    %v183 = vpop.f32.mrb[0].mxu0
    %184 = vdwg.mxu0
    %v185 = vld [vmem:[%s4] sm:$0x1]
    %v187 = vlaneseq
    %v188 = vshrl.u32 %v187, 7
    %v189 = vsub.s32 0, %v188
    %v190 = vrot.slane %v185, %v189
    %v192 = vadd.f32 %v182, %v190
    %v193 = vtanh.pop %v192
    %v194 = vld [vmem:[%s5] sm:$0xff]
    %v195 = vld [vmem:[%s5 + $0x8] sm:$0xff]
    %v196 = vld [vmem:[%s5 + $0x10] sm:$0xff]
    %v197 = vld [vmem:[%s5 + $0x18] sm:$0xff]
    %v198 = vld [vmem:[%s6] sm:$0x1]
    %v200 = vlaneseq
    %v201 = vshrl.u32 %v200, 7
    %v202 = vsub.s32 0, %v201
    %v203 = vrot.slane %v198, %v202
    %vm205 = vcmask 261120
    %v207 = vsel %vm205, %v193, 0
    %209 = vmatprep.subr.mxu0 0.0
    %210 = vmatpush1.msra.mxu0 %v194
    %211 = vmatprep.subr.mxu0 0.0
    %212 = vmatpush1.msra.mxu0 %v195
    %213 = vmatprep.subr.mxu0 0.0
    %214 = vmatpush1.msra.mxu0 %v196
    %215 = vmatprep.subr.mxu0 0.0
    %216 = vmatpush1.msra.mxu0 %v197
    %217 = vmatprep.subr.mxu0 0.0
    %218 = vmatpush1.msra.mxu0 0.0
    %219 = vmatprep.subr.mxu0 0.0
    %220 = vmatpush1.msra.mxu0 0.0
    %221 = vmatprep.subr.mxu0 0.0
    %222 = vmatpush1.msra.mxu0 0.0
    %223 = vmatprep.subr.mxu0 0.0
    %224 = vmatpush1.msra.mxu0 0.0
    %225 = vmatprep.subr.mxu0 0.0
    %226 = vmatpush1.msra.mxu0 0.0
    %227 = vmatprep.subr.mxu0 0.0
    %228 = vmatpush1.msra.mxu0 0.0
    %229 = vmatprep.subr.mxu0 0.0
    %230 = vmatpush1.msra.mxu0 0.0
    %231 = vmatprep.subr.mxu0 0.0
    %232 = vmatpush1.msra.mxu0 0.0
    %233 = vmatprep.subr.mxu0 0.0
    %234 = vmatpush1.msra.mxu0 0.0
    %235 = vmatprep.subr.mxu0 0.0
    %236 = vmatpush1.msra.mxu0 0.0
    %237 = vmatprep.subr.mxu0 0.0
    %238 = vmatpush1.msra.mxu0 0.0
    %239 = vmatprep.subr.mxu0 0.0
    %240 = vmatpush1.msra.mxu0 0.0
    %241 = vmatprep.subr.mxu0 0.0
    %242 = vmatpush1.msra.mxu0 0.0
    %243 = vmatprep.subr.mxu0 0.0
    %244 = vmatpush1.msra.mxu0 0.0
    %245 = vmatprep.subr.mxu0 0.0
    %246 = vmatpush1.msra.mxu0 0.0
    %247 = vmatprep.subr.mxu0 0.0
    %248 = vmatpush1.msra.mxu0 0.0
    %249 = vmatprep.subr.mxu0 0.0
    %250 = vmatpush1.msra.mxu0 0.0
    %251 = vmatprep.subr.mxu0 0.0
    %252 = vmatpush1.msra.mxu0 0.0
    %253 = vmatprep.subr.mxu0 0.0
    %254 = vmatpush1.msra.mxu0 0.0
    %255 = vmatprep.subr.mxu0 0.0
    %256 = vmatpush1.msra.mxu0 0.0
    %257 = vmatprep.subr.mxu0 0.0
    %258 = vmatpush1.msra.mxu0 0.0
    %259 = vmatprep.subr.mxu0 0.0
    %260 = vmatpush1.msra.mxu0 0.0
    %261 = vmatprep.subr.mxu0 0.0
    %262 = vmatpush1.msra.mxu0 0.0
    %263 = vmatprep.subr.mxu0 0.0
    %264 = vmatpush1.msra.mxu0 0.0
    %265 = vmatprep.subr.mxu0 0.0
    %266 = vmatpush1.msra.mxu0 0.0
    %267 = vmatprep.subr.mxu0 0.0
    %268 = vmatpush1.msra.mxu0 0.0
    %269 = vmatprep.subr.mxu0 0.0
    %270 = vmatpush1.msra.mxu0 0.0
    %271 = vmatprep.subr.mxu0 0.0
    %272 = vmatpush1.msra.mxu0 0.0
    %273 = vmatprep.mubr.f32.mxu0 0.0
    %274 = vmatmul.mubr.f32.gmra.mrb[0].mxu0 %v207
    %v275 = vpop.f32.mrb[0].mxu0
    %v276 = vadd.f32 %v203, %v275
    %v277 = vpop.f32.mrb[0].mxu0
    %278 = vdwg.mxu0
    %vm279 = vcmask 41984
    %280 = vst.msk [vmem:[#allocation2] sm:$0x3] %vm279, %v276
    // Predicated region
    $region30: #{invnet_forward.1} parent=1 // pred_check
      _
    $region31: #{invnet_forward.1} parent=1 // pred_check_branch
      %282 = sbr.rel (0) target = $region33
    $region32: #{invnet_forward.1} parent=1 // pred_region
      %s284 = ssub.s32 32, 32
      %285 = vsyncadd [#allocation3], %s284
      %s287 = sshll.u32 [#allocation2], 4
      %s288 = int_to_ptr.vmem [resolvable:$true] %s287
      %290 = dma.vmem_to_hbm [thread:$0]  %s288, 32, %s7, [#allocation3]
    $region33: #{invnet_forward.1} parent=1 // pred_fallthru
      _
    // Predicated region
    $region34: #{invnet_forward.1} parent=1 // pred_check
      _
    $region35: #{invnet_forward.1} parent=1 // pred_check_branch
      %292 = sbr.rel (0) target = $region37
    $region36: #{invnet_forward.1} parent=1 // pred_region
      %293 = dma.done [#allocation3], 32
    $region37: #{invnet_forward.1} parent=1 // pred_fallthru
      _
    %294 = vsyncpa [#allocation3], 1

</llo_original>
